<compile_context>
chip_gen: v5e
topology: v5e:2x2
jax: 0.10.0
libtpu: 0.0.40
codegen_flags: <defaults>
</compile_context>

<pallas_src>
import functools

import jax
import jax.numpy as jnp
from jax import lax
from jax.experimental import pallas as pl
from jax.experimental.pallas import tpu as pltpu


def _mod(a, m):
    """a % m using a bitwise AND when the static modulus is a power of two."""
    if m & (m - 1) == 0:
        return a & (m - 1)
    return a % m


def _mish_fast(x):
    # mish(x) = x * tanh(softplus(x)) = x * (1 - 2 / ((1 + e^x)^2 + 1))
    # one exp + one approx reciprocal, both on the EUP slot; inf-safe.
    t = jnp.exp(x) + 1.0
    return x * (1.0 - 2.0 * pl.reciprocal(t * t + 1.0, approx=True))


def _bottleneck_kernel(x_ref, w1_ref, t1_ref, w2_ref, t2_ref, o_ref, slab_ref,
                       *, H, W):
    """Channels on sublanes, (batch*H*W) on lanes.

    x_ref   : (Cin, BL)        f32 input band (BL = nb*H*W, image-major lanes)
    w1_ref  : (Cmid_p, Cin)    bf16 1x1 conv weight, BN1 scale folded in
    t1_ref  : (Cmid_p, 1)      f32 folded BN1 shift (conv bias folded in)
    w2_ref  : (Cout, 9*Cmid_p) bf16 3x3 conv weight (tap-major K), BN2 scale folded
    t2_ref  : (Cout, 1)        f32 folded BN2 shift
    o_ref   : (Cout, BL)       f32 output band
    slab_ref: (9*Cmid_p, BL)   bf16 im2col scratch slab
    """
    HW = H * W
    BL = x_ref.shape[1]
    Cm = w1_ref.shape[0]                                    # padded mid channels

    x = x_ref[...]                                          # (Cin, BL) f32

    # ---- conv1: 1x1 conv == channel matmul (bf16 operands, f32 acc) ----
    y = jnp.dot(w1_ref[...], x.astype(jnp.bfloat16),
                preferred_element_type=jnp.float32)         # (Cm, BL)
    y = _mish_fast(y + t1_ref[...])                         # BN1 scale lives in w1

    # ---- conv2: 3x3 pad=1 as ONE im2col matmul (K = 9*Cm) ----
    # Boundary masks computed once and reused by every tap.  Row masks also stop
    # taps from bleeding across the per-image seams of the fused lane axis.
    pos = lax.broadcasted_iota(jnp.int32, (1, BL), 1)
    col = _mod(pos, W)
    rpx = _mod(pos, HW)
    left_ok = col != 0               # tap reads pixel (h, w-1)
    right_ok = col != (W - 1)        # tap reads pixel (h, w+1)
    top_ok = rpx >= W                # tap reads pixel (h-1, w)
    bot_ok = rpx < (HW - W)          # tap reads pixel (h+1, w)
    row_masks = (top_ok, None, bot_ok)
    col_masks = (left_ok, None, right_ok)

    for ky in range(3):
        for kx in range(3):
            d = (ky - 1) * W + (kx - 1)          # flat lane offset of this tap
            # tap[i] = y[i + d] (circular; the wrap lands on masked boundary rows)
            tap = y if d == 0 else pltpu.roll(y, shift=(-d) % BL, axis=1)
            rmask, cmask = row_masks[ky], col_masks[kx]
            if rmask is not None and cmask is not None:
                m = rmask & cmask
            else:
                m = rmask if rmask is not None else cmask
            if m is not None:
                tap = jnp.where(m, tap, 0.0)
            t = ky * 3 + kx
            slab_ref[t * Cm:(t + 1) * Cm, :] = tap.astype(jnp.bfloat16)

    z = jnp.dot(w2_ref[...], slab_ref[...],
                preferred_element_type=jnp.float32)         # (Cout, BL)
    z = _mish_fast(z + t2_ref[...])                         # BN2 scale lives in w2

    # ---- residual add (Cin == Cout) ----
    o_ref[...] = (z + x).astype(o_ref.dtype)


def darknet_bottleneck_pallas(x, params, eps=1e-5):
    N, Cin, H, W = x.shape
    w1, w2 = params["w1"], params["w2"]
    Cmid = w1.shape[0]
    Cout = w2.shape[0]
    assert w1.shape == (Cmid, Cin, 1, 1) and w2.shape == (Cout, Cmid, 3, 3)
    assert Cin == Cout, "residual add requires in_channels == out_channels"
    HW = H * W
    Cmid_p = ((Cmid + 15) // 16) * 16            # bf16 sublane-tile aligned

    # ---- fold conv bias + inference BN: scales into weights, shifts kept ----
    s1 = params["g1"] / jnp.sqrt(params["v1"] + eps)
    t1 = s1 * (params["b1"] - params["m1"]) + params["be1"]
    s2 = params["g2"] / jnp.sqrt(params["v2"] + eps)
    t2 = s2 * (params["b2"] - params["m2"]) + params["be2"]

    pad1 = Cmid_p - Cmid
    w1_mat = jnp.pad(w1[:, :, 0, 0] * s1[:, None],
                     ((0, pad1), (0, 0))).astype(jnp.bfloat16)   # (Cmid_p, Cin)
    t1_p = jnp.pad(t1, (0, pad1)).reshape(Cmid_p, 1)
    # (Cout,Cmid,3,3)*s2 -> (Cout, ky, kx, Cmid_p) -> (Cout, 9*Cmid_p), tap-major K
    w2_t = jnp.pad(jnp.transpose(w2 * s2[:, None, None, None], (0, 2, 3, 1)),
                   ((0, 0), (0, 0), (0, 0), (0, pad1)))
    w2_mat = w2_t.reshape(Cout, 9 * Cmid_p).astype(jnp.bfloat16)
    t2_p = t2.reshape(Cout, 1)

    # ---- layout: channels on sublanes, batch fused into the lane axis ----
    x_cm = jnp.transpose(x.reshape(N, Cin, HW), (1, 0, 2)).reshape(Cin, N * HW)

    # images per grid step: as many as fit a modest per-step working set.
    w_bytes = 2 * (w1_mat.size + w2_mat.size) * 2 + 2 * (Cmid_p + Cout) * 4

    def step_bytes(nb):
        bl = nb * HW
        return (2 * 2 * (Cin + Cout) * bl * 4           # in/out, double-buffered
                + 9 * Cmid_p * bl * 2                    # bf16 slab scratch
                + (3 * Cmid_p + 2 * Cout + Cin) * bl * 4  # live f32 intermediates
                + w_bytes)

    nb = 1
    for cand in range(N, 0, -1):
        if N % cand:
            continue
        if cand != N and (cand * HW) % 128 != 0:          # keep lane blocks aligned
            continue
        if step_bytes(cand) <= 24 * 1024 * 1024:
            nb = cand
            break
    BL = nb * HW

    kind = jax.devices()[0].device_kind.lower()
    phys_cap = (64 << 20) if "v7" in kind else (100 << 20)   # v7x: 64 MiB VMEM
    vmem_limit = int(min(max(2 * step_bytes(nb), 32 << 20), phys_cap))

    kernel = functools.partial(_bottleneck_kernel, H=H, W=W)
    out_cm = pl.pallas_call(
        kernel,
        out_shape=jax.ShapeDtypeStruct((Cout, N * HW), x.dtype),
        grid_spec=pltpu.PrefetchScalarGridSpec(
            num_scalar_prefetch=0,
            grid=(N // nb,),
            in_specs=[
                pl.BlockSpec((Cin, BL), lambda g: (0, g)),
                # TODO(synk): single-buffer these grid-invariant weight inputs
                # (pipeline_mode=pl.Buffered(1)) for real channel counts on v7x.
                pl.BlockSpec((Cmid_p, Cin), lambda g: (0, 0)),
                pl.BlockSpec((Cmid_p, 1), lambda g: (0, 0)),
                pl.BlockSpec((Cout, 9 * Cmid_p), lambda g: (0, 0)),
                pl.BlockSpec((Cout, 1), lambda g: (0, 0)),
            ],
            out_specs=pl.BlockSpec((Cout, BL), lambda g: (0, g)),
            scratch_shapes=[pltpu.VMEM((9 * Cmid_p, BL), jnp.bfloat16)],
        ),
        compiler_params=pltpu.CompilerParams(
            dimension_semantics=("parallel",),
            vmem_limit_bytes=vmem_limit),
    )(x_cm, w1_mat, t1_p, w2_mat, t2_p)

    # TODO(synk): at real YOLO resolutions replace whole-image lane bands with a
    # row-band grid axis + 1-row halo so per-step VMEM stays ~8-16 MiB on v7x.
    return jnp.transpose(out_cm.reshape(Cout, N, H, W), (1, 0, 2, 3))


# ----------------------- pure-JAX reference (NCHW, f32) ---------------------
def _mish_ref(x):
    return x * jnp.tanh(jax.nn.softplus(x))


def _bn(y_nchw, gamma, beta, mean, var, eps=1e-5):
    inv = gamma / jnp.sqrt(var + eps)
    return (y_nchw - mean[None, :, None, None]) * inv[None, :, None, None] \
        + beta[None, :, None, None]


def ref_forward(x, p):
    y = lax.conv_general_dilated(x, p["w1"], (1, 1), ((0, 0), (0, 0)),
                                 dimension_numbers=("NCHW", "OIHW", "NCHW"))
    y = y + p["b1"][None, :, None, None]
    y = _mish_ref(_bn(y, p["g1"], p["be1"], p["m1"], p["v1"]))
    z = lax.conv_general_dilated(y, p["w2"], (1, 1), ((1, 1), (1, 1)),
                                 dimension_numbers=("NCHW", "OIHW", "NCHW"))
    z = z + p["b2"][None, :, None, None]
    z = _mish_ref(_bn(z, p["g2"], p["be2"], p["m2"], p["v2"]))
    return z + x


if __name__ == "__main__":
    # Small shapes: in_channels == out_channels == 8 (needed for the residual),
    # expansion = 2 -> mid_channels = 4.  Batch fuses into the lane axis (512 lanes).
    N, C, H, W = 2, 8, 16, 16
    Cin = Cout = C
    Cmid = Cout // 2

    key = jax.random.PRNGKey(0)
    ks = jax.random.split(key, 13)

    params = {
        # conv1: 1x1  (OIHW)
        "w1": jax.random.normal(ks[0], (Cmid, Cin, 1, 1), jnp.float32) * 0.3,
        "b1": jax.random.normal(ks[1], (Cmid,), jnp.float32) * 0.1,
        "g1": 1.0 + 0.1 * jax.random.normal(ks[2], (Cmid,), jnp.float32),
        "be1": 0.1 * jax.random.normal(ks[3], (Cmid,), jnp.float32),
        "m1": 0.1 * jax.random.normal(ks[4], (Cmid,), jnp.float32),
        "v1": 1.0 + 0.1 * jax.random.uniform(ks[5], (Cmid,), jnp.float32),
        # conv2: 3x3  (OIHW)
        "w2": jax.random.normal(ks[6], (Cout, Cmid, 3, 3), jnp.float32) * 0.2,
        "b2": jax.random.normal(ks[7], (Cout,), jnp.float32) * 0.1,
        "g2": 1.0 + 0.1 * jax.random.normal(ks[8], (Cout,), jnp.float32),
        "be2": 0.1 * jax.random.normal(ks[9], (Cout,), jnp.float32),
        "m2": 0.1 * jax.random.normal(ks[10], (Cout,), jnp.float32),
        "v2": 1.0 + 0.1 * jax.random.uniform(ks[11], (Cout,), jnp.float32),
    }

    x = jax.random.normal(ks[12], (N, C, H, W), jnp.float32)

    out = jax.block_until_ready(darknet_bottleneck_pallas(x, params))
    ref = jax.block_until_ready(ref_forward(x, params))

    assert out.shape == (N, Cout, H, W)
    # bf16 MXU operands (f32 accumulation) + approx-reciprocal mish ->
    # compare at bf16-level tolerance.
    max_err = jnp.max(jnp.abs(out - ref))
    assert jnp.allclose(out, ref, rtol=5e-2, atol=5e-2), f"max err {max_err}"

    print("KERNEL_OK")
</pallas_src>

<mosaic_0001>
module attributes {stable_mosaic.version = 11 : i64} {
  func.func @_bottleneck_kernel(%arg0: i32, %arg1: memref<8x512xf32, #tpu.memory_space<vmem>>, %arg2: memref<16x8xbf16, #tpu.memory_space<vmem>>, %arg3: memref<16x1xf32, #tpu.memory_space<vmem>>, %arg4: memref<8x144xbf16, #tpu.memory_space<vmem>>, %arg5: memref<8x1xf32, #tpu.memory_space<vmem>>, %arg6: memref<8x512xf32, #tpu.memory_space<vmem>>, %arg7: memref<144x512xbf16, #tpu.memory_space<vmem>>) attributes {dimension_semantics = [#tpu.dimension_semantics<parallel>], iteration_bounds = array<i64: 1>, scalar_prefetch = 0 : i64, scratch_operands = 1 : i64, tpu.core_type = #tpu.core_type<tc>, window_params = [{transform_indices = @transform_0, window_bounds = array<i64: 8, 512>}, {pipeline_mode = #tpu.pipeline_mode<synchronous>, transform_indices = @transform_1, window_bounds = array<i64: 16, 8>}, {pipeline_mode = #tpu.pipeline_mode<synchronous>, transform_indices = @transform_2, window_bounds = array<i64: 16, 1>}, {pipeline_mode = #tpu.pipeline_mode<synchronous>, transform_indices = @transform_3, window_bounds = array<i64: 8, 144>}, {pipeline_mode = #tpu.pipeline_mode<synchronous>, transform_indices = @transform_4, window_bounds = array<i64: 8, 1>}, {transform_indices = @transform_5, window_bounds = array<i64: 8, 512>}]} {
    %c0 = arith.constant 0 : index
    %c0_0 = arith.constant 0 : index
    %0 = vector.load %arg1[%c0, %c0_0] : memref<8x512xf32, #tpu.memory_space<vmem>>, vector<8x512xf32>
    %c0_1 = arith.constant 0 : index
    %c0_2 = arith.constant 0 : index
    %1 = vector.load %arg2[%c0_1, %c0_2] : memref<16x8xbf16, #tpu.memory_space<vmem>>, vector<16x8xbf16>
    %2 = arith.truncf %0 : vector<8x512xf32> to vector<8x512xbf16>
    %cst = arith.constant dense<0.000000e+00> : vector<16x512xf32>
    %3 = tpu.matmul %1, %2, %cst {dimension_numbers = #tpu.dot_dimension_numbers<[1], [0], [0], [1], [0, 0, 1, 1], [], []>} : vector<16x8xbf16>, vector<8x512xbf16>, vector<16x512xf32> -> vector<16x512xf32>
    %c0_3 = arith.constant 0 : index
    %c0_4 = arith.constant 0 : index
    %4 = vector.load %arg3[%c0_3, %c0_4] : memref<16x1xf32, #tpu.memory_space<vmem>>, vector<16x1xf32>
    %5 = vector.broadcast %4 : vector<16x1xf32> to vector<16x512xf32>
    %6 = arith.addf %3, %5 : vector<16x512xf32>
    %7 = math.exp %6 : vector<16x512xf32>
    %cst_5 = arith.constant 1.000000e+00 : f32
    %8 = vector.broadcast %cst_5 : f32 to vector<16x512xf32>
    %9 = arith.addf %7, %8 : vector<16x512xf32>
    %10 = arith.mulf %9, %9 : vector<16x512xf32>
    %cst_6 = arith.constant 1.000000e+00 : f32
    %11 = vector.broadcast %cst_6 : f32 to vector<16x512xf32>
    %12 = arith.addf %10, %11 : vector<16x512xf32>
    %13 = tpu.reciprocal %12 {approx = true} : vector<16x512xf32> -> vector<16x512xf32>
    %cst_7 = arith.constant 2.000000e+00 : f32
    %14 = vector.broadcast %cst_7 : f32 to vector<16x512xf32>
    %15 = arith.mulf %14, %13 : vector<16x512xf32>
    %cst_8 = arith.constant 1.000000e+00 : f32
    %16 = vector.broadcast %cst_8 : f32 to vector<16x512xf32>
    %17 = arith.subf %16, %15 : vector<16x512xf32>
    %18 = arith.mulf %6, %17 : vector<16x512xf32>
    %19 = tpu.iota {dimensions = array<i32: 1>} : vector<1x512xi32>
    %c15_i32 = arith.constant 15 : i32
    %20 = vector.broadcast %c15_i32 : i32 to vector<1x512xi32>
    %21 = arith.andi %19, %20 : vector<1x512xi32>
    %c255_i32 = arith.constant 255 : i32
    %22 = vector.broadcast %c255_i32 : i32 to vector<1x512xi32>
    %23 = arith.andi %19, %22 : vector<1x512xi32>
    %c0_i32 = arith.constant 0 : i32
    %24 = vector.broadcast %c0_i32 : i32 to vector<1x512xi32>
    %25 = arith.cmpi ne, %21, %24 : vector<1x512xi32>
    %c15_i32_9 = arith.constant 15 : i32
    %26 = vector.broadcast %c15_i32_9 : i32 to vector<1x512xi32>
    %27 = arith.cmpi ne, %21, %26 : vector<1x512xi32>
    %c16_i32 = arith.constant 16 : i32
    %28 = vector.broadcast %c16_i32 : i32 to vector<1x512xi32>
    %29 = arith.cmpi sge, %23, %28 : vector<1x512xi32>
    %c240_i32 = arith.constant 240 : i32
    %30 = vector.broadcast %c240_i32 : i32 to vector<1x512xi32>
    %31 = arith.cmpi slt, %23, %30 : vector<1x512xi32>
    %c17_i32 = arith.constant 17 : i32
    %32 = tpu.dynamic_rotate %18 by %c17_i32 dim 1 : vector<16x512xf32>, i32 -> vector<16x512xf32>
    %33 = arith.andi %29, %25 : vector<1x512xi1>
    %cst_10 = arith.constant 0.000000e+00 : f32
    %34 = vector.shape_cast %33 : vector<1x512xi1> to vector<1x512xi1>
    %35 = vector.broadcast %34 : vector<1x512xi1> to vector<16x512xi1>
    %36 = vector.broadcast %cst_10 : f32 to vector<16x512xf32>
    %37 = arith.select %35, %32, %36 : vector<16x512xi1>, vector<16x512xf32>
    %38 = arith.truncf %37 : vector<16x512xf32> to vector<16x512xbf16>
    %c0_11 = arith.constant 0 : index
    %c0_12 = arith.constant 0 : index
    %39 = vector.load %arg7[%c0_11, %c0_12] : memref<144x512xbf16, #tpu.memory_space<vmem>>, vector<16x512xbf16>
    tpu.vector_store %arg7[%c0_11, %c0_12], %38 {strides = array<i32>} : memref<144x512xbf16, #tpu.memory_space<vmem>>, vector<16x512xbf16>,
    %c16_i32_13 = arith.constant 16 : i32
    %40 = tpu.dynamic_rotate %18 by %c16_i32_13 dim 1 : vector<16x512xf32>, i32 -> vector<16x512xf32>
    %cst_14 = arith.constant 0.000000e+00 : f32
    %41 = vector.shape_cast %29 : vector<1x512xi1> to vector<1x512xi1>
    %42 = vector.broadcast %41 : vector<1x512xi1> to vector<16x512xi1>
    %43 = vector.broadcast %cst_14 : f32 to vector<16x512xf32>
    %44 = arith.select %42, %40, %43 : vector<16x512xi1>, vector<16x512xf32>
    %45 = arith.truncf %44 : vector<16x512xf32> to vector<16x512xbf16>
    %c16 = arith.constant 16 : index
    %c0_15 = arith.constant 0 : index
    %46 = vector.load %arg7[%c16, %c0_15] : memref<144x512xbf16, #tpu.memory_space<vmem>>, vector<16x512xbf16>
    tpu.vector_store %arg7[%c16, %c0_15], %45 {strides = array<i32>} : memref<144x512xbf16, #tpu.memory_space<vmem>>, vector<16x512xbf16>,
    %c15_i32_16 = arith.constant 15 : i32
    %47 = tpu.dynamic_rotate %18 by %c15_i32_16 dim 1 : vector<16x512xf32>, i32 -> vector<16x512xf32>
    %48 = arith.andi %29, %27 : vector<1x512xi1>
    %cst_17 = arith.constant 0.000000e+00 : f32
    %49 = vector.shape_cast %48 : vector<1x512xi1> to vector<1x512xi1>
    %50 = vector.broadcast %49 : vector<1x512xi1> to vector<16x512xi1>
    %51 = vector.broadcast %cst_17 : f32 to vector<16x512xf32>
    %52 = arith.select %50, %47, %51 : vector<16x512xi1>, vector<16x512xf32>
    %53 = arith.truncf %52 : vector<16x512xf32> to vector<16x512xbf16>
    %c32 = arith.constant 32 : index
    %c0_18 = arith.constant 0 : index
    %54 = vector.load %arg7[%c32, %c0_18] : memref<144x512xbf16, #tpu.memory_space<vmem>>, vector<16x512xbf16>
    tpu.vector_store %arg7[%c32, %c0_18], %53 {strides = array<i32>} : memref<144x512xbf16, #tpu.memory_space<vmem>>, vector<16x512xbf16>,
    %c1_i32 = arith.constant 1 : i32
    %55 = tpu.dynamic_rotate %18 by %c1_i32 dim 1 : vector<16x512xf32>, i32 -> vector<16x512xf32>
    %cst_19 = arith.constant 0.000000e+00 : f32
    %56 = vector.shape_cast %25 : vector<1x512xi1> to vector<1x512xi1>
    %57 = vector.broadcast %56 : vector<1x512xi1> to vector<16x512xi1>
    %58 = vector.broadcast %cst_19 : f32 to vector<16x512xf32>
    %59 = arith.select %57, %55, %58 : vector<16x512xi1>, vector<16x512xf32>
    %60 = arith.truncf %59 : vector<16x512xf32> to vector<16x512xbf16>
    %c48 = arith.constant 48 : index
    %c0_20 = arith.constant 0 : index
    %61 = vector.load %arg7[%c48, %c0_20] : memref<144x512xbf16, #tpu.memory_space<vmem>>, vector<16x512xbf16>
    tpu.vector_store %arg7[%c48, %c0_20], %60 {strides = array<i32>} : memref<144x512xbf16, #tpu.memory_space<vmem>>, vector<16x512xbf16>,
    %62 = arith.truncf %18 : vector<16x512xf32> to vector<16x512xbf16>
    %c64 = arith.constant 64 : index
    %c0_21 = arith.constant 0 : index
    %63 = vector.load %arg7[%c64, %c0_21] : memref<144x512xbf16, #tpu.memory_space<vmem>>, vector<16x512xbf16>
    tpu.vector_store %arg7[%c64, %c0_21], %62 {strides = array<i32>} : memref<144x512xbf16, #tpu.memory_space<vmem>>, vector<16x512xbf16>,
    %c511_i32 = arith.constant 511 : i32
    %64 = tpu.dynamic_rotate %18 by %c511_i32 dim 1 : vector<16x512xf32>, i32 -> vector<16x512xf32>
    %cst_22 = arith.constant 0.000000e+00 : f32
    %65 = vector.shape_cast %27 : vector<1x512xi1> to vector<1x512xi1>
    %66 = vector.broadcast %65 : vector<1x512xi1> to vector<16x512xi1>
    %67 = vector.broadcast %cst_22 : f32 to vector<16x512xf32>
    %68 = arith.select %66, %64, %67 : vector<16x512xi1>, vector<16x512xf32>
    %69 = arith.truncf %68 : vector<16x512xf32> to vector<16x512xbf16>
    %c80 = arith.constant 80 : index
    %c0_23 = arith.constant 0 : index
    %70 = vector.load %arg7[%c80, %c0_23] : memref<144x512xbf16, #tpu.memory_space<vmem>>, vector<16x512xbf16>
    tpu.vector_store %arg7[%c80, %c0_23], %69 {strides = array<i32>} : memref<144x512xbf16, #tpu.memory_space<vmem>>, vector<16x512xbf16>,
    %c497_i32 = arith.constant 497 : i32
    %71 = tpu.dynamic_rotate %18 by %c497_i32 dim 1 : vector<16x512xf32>, i32 -> vector<16x512xf32>
    %72 = arith.andi %31, %25 : vector<1x512xi1>
    %cst_24 = arith.constant 0.000000e+00 : f32
    %73 = vector.shape_cast %72 : vector<1x512xi1> to vector<1x512xi1>
    %74 = vector.broadcast %73 : vector<1x512xi1> to vector<16x512xi1>
    %75 = vector.broadcast %cst_24 : f32 to vector<16x512xf32>
    %76 = arith.select %74, %71, %75 : vector<16x512xi1>, vector<16x512xf32>
    %77 = arith.truncf %76 : vector<16x512xf32> to vector<16x512xbf16>
    %c96 = arith.constant 96 : index
    %c0_25 = arith.constant 0 : index
    %78 = vector.load %arg7[%c96, %c0_25] : memref<144x512xbf16, #tpu.memory_space<vmem>>, vector<16x512xbf16>
    tpu.vector_store %arg7[%c96, %c0_25], %77 {strides = array<i32>} : memref<144x512xbf16, #tpu.memory_space<vmem>>, vector<16x512xbf16>,
    %c496_i32 = arith.constant 496 : i32
    %79 = tpu.dynamic_rotate %18 by %c496_i32 dim 1 : vector<16x512xf32>, i32 -> vector<16x512xf32>
    %cst_26 = arith.constant 0.000000e+00 : f32
    %80 = vector.shape_cast %31 : vector<1x512xi1> to vector<1x512xi1>
    %81 = vector.broadcast %80 : vector<1x512xi1> to vector<16x512xi1>
    %82 = vector.broadcast %cst_26 : f32 to vector<16x512xf32>
    %83 = arith.select %81, %79, %82 : vector<16x512xi1>, vector<16x512xf32>
    %84 = arith.truncf %83 : vector<16x512xf32> to vector<16x512xbf16>
    %c112 = arith.constant 112 : index
    %c0_27 = arith.constant 0 : index
    %85 = vector.load %arg7[%c112, %c0_27] : memref<144x512xbf16, #tpu.memory_space<vmem>>, vector<16x512xbf16>
    tpu.vector_store %arg7[%c112, %c0_27], %84 {strides = array<i32>} : memref<144x512xbf16, #tpu.memory_space<vmem>>, vector<16x512xbf16>,
    %c495_i32 = arith.constant 495 : i32
    %86 = tpu.dynamic_rotate %18 by %c495_i32 dim 1 : vector<16x512xf32>, i32 -> vector<16x512xf32>
    %87 = arith.andi %31, %27 : vector<1x512xi1>
    %cst_28 = arith.constant 0.000000e+00 : f32
    %88 = vector.shape_cast %87 : vector<1x512xi1> to vector<1x512xi1>
    %89 = vector.broadcast %88 : vector<1x512xi1> to vector<16x512xi1>
    %90 = vector.broadcast %cst_28 : f32 to vector<16x512xf32>
    %91 = arith.select %89, %86, %90 : vector<16x512xi1>, vector<16x512xf32>
    %92 = arith.truncf %91 : vector<16x512xf32> to vector<16x512xbf16>
    %c128 = arith.constant 128 : index
    %c0_29 = arith.constant 0 : index
    %93 = vector.load %arg7[%c128, %c0_29] : memref<144x512xbf16, #tpu.memory_space<vmem>>, vector<16x512xbf16>
    tpu.vector_store %arg7[%c128, %c0_29], %92 {strides = array<i32>} : memref<144x512xbf16, #tpu.memory_space<vmem>>, vector<16x512xbf16>,
    %c0_30 = arith.constant 0 : index
    %c0_31 = arith.constant 0 : index
    %94 = vector.load %arg4[%c0_30, %c0_31] : memref<8x144xbf16, #tpu.memory_space<vmem>>, vector<8x144xbf16>
    %c0_32 = arith.constant 0 : index
    %c0_33 = arith.constant 0 : index
    %95 = vector.load %arg7[%c0_32, %c0_33] : memref<144x512xbf16, #tpu.memory_space<vmem>>, vector<144x512xbf16>
    %cst_34 = arith.constant dense<0.000000e+00> : vector<8x512xf32>
    %96 = tpu.matmul %94, %95, %cst_34 {dimension_numbers = #tpu.dot_dimension_numbers<[1], [0], [0], [1], [0, 0, 1, 1], [], []>} : vector<8x144xbf16>, vector<144x512xbf16>, vector<8x512xf32> -> vector<8x512xf32>
    %c0_35 = arith.constant 0 : index
    %c0_36 = arith.constant 0 : index
    %97 = vector.load %arg5[%c0_35, %c0_36] : memref<8x1xf32, #tpu.memory_space<vmem>>, vector<8x1xf32>
    %98 = vector.broadcast %97 : vector<8x1xf32> to vector<8x512xf32>
    %99 = arith.addf %96, %98 : vector<8x512xf32>
    %100 = math.exp %99 : vector<8x512xf32>
    %cst_37 = arith.constant 1.000000e+00 : f32
    %101 = vector.broadcast %cst_37 : f32 to vector<8x512xf32>
    %102 = arith.addf %100, %101 : vector<8x512xf32>
    %103 = arith.mulf %102, %102 : vector<8x512xf32>
    %cst_38 = arith.constant 1.000000e+00 : f32
    %104 = vector.broadcast %cst_38 : f32 to vector<8x512xf32>
    %105 = arith.addf %103, %104 : vector<8x512xf32>
    %106 = tpu.reciprocal %105 {approx = true} : vector<8x512xf32> -> vector<8x512xf32>
    %cst_39 = arith.constant 2.000000e+00 : f32
    %107 = vector.broadcast %cst_39 : f32 to vector<8x512xf32>
    %108 = arith.mulf %107, %106 : vector<8x512xf32>
    %cst_40 = arith.constant 1.000000e+00 : f32
    %109 = vector.broadcast %cst_40 : f32 to vector<8x512xf32>
    %110 = arith.subf %109, %108 : vector<8x512xf32>
    %111 = arith.mulf %99, %110 : vector<8x512xf32>
    %112 = arith.addf %111, %0 : vector<8x512xf32>
    %c0_41 = arith.constant 0 : index
    %c0_42 = arith.constant 0 : index
    %113 = vector.load %arg6[%c0_41, %c0_42] : memref<8x512xf32, #tpu.memory_space<vmem>>, vector<8x512xf32>
    tpu.vector_store %arg6[%c0_41, %c0_42], %112 {strides = array<i32>} : memref<8x512xf32, #tpu.memory_space<vmem>>, vector<8x512xf32>,
    return
  }
  func.func @transform_0(%arg0: i32) -> (i32, i32) {
    %c0_i32 = arith.constant 0 : i32
    %c0_i32_0 = arith.constant 0 : i32
    return %c0_i32, %arg0 : i32, i32
  }
  func.func @transform_1(%arg0: i32) -> (i32, i32) {
    %c0_i32 = arith.constant 0 : i32
    %c0_i32_0 = arith.constant 0 : i32
    %c0_i32_1 = arith.constant 0 : i32
    return %c0_i32, %c0_i32_0 : i32, i32
  }
  func.func @transform_2(%arg0: i32) -> (i32, i32) {
    %c0_i32 = arith.constant 0 : i32
    %c0_i32_0 = arith.constant 0 : i32
    %c0_i32_1 = arith.constant 0 : i32
    return %c0_i32, %c0_i32_0 : i32, i32
  }
  func.func @transform_3(%arg0: i32) -> (i32, i32) {
    %c0_i32 = arith.constant 0 : i32
    %c0_i32_0 = arith.constant 0 : i32
    %c0_i32_1 = arith.constant 0 : i32
    return %c0_i32, %c0_i32_0 : i32, i32
  }
  func.func @transform_4(%arg0: i32) -> (i32, i32) {
    %c0_i32 = arith.constant 0 : i32
    %c0_i32_0 = arith.constant 0 : i32
    %c0_i32_1 = arith.constant 0 : i32
    return %c0_i32, %c0_i32_0 : i32, i32
  }
  func.func @transform_5(%arg0: i32) -> (i32, i32) {
    %c0_i32 = arith.constant 0 : i32
    %c0_i32_0 = arith.constant 0 : i32
    return %c0_i32, %arg0 : i32, i32
  }
}

</mosaic_0001>

<llo_original>
// kernel: tpu_custom_call.1
$region0: #{tpu_custom_call.1}
  #allocation0 [shape = 'u32[]', space=smem, size = 0x4, offset = 0x4, fixed_abs, tag = 'smem constant byte address 0x4 - core index']
  #allocation1 [shape = 'u32[72,128]{1,0:T(1,128)}', space=vmem, size = 0x9000, scoped, tag = 'internal scratch']
  #allocation2 [shape = 'bf16[144,512]{1,0:T(8,128)(2,1)}', space=vmem, size = 0x24000, scoped, tag = 'scratch operand']
  %s0 = inlined_call_operand.hbm [shape: f32[8,512], index: 0, kind: input, shape index: {}]
  %s1 = inlined_call_operand.vmem [shape: bf16[16,8], index: 1, kind: input, shape index: {}]
  %s2 = inlined_call_operand.vmem [shape: f32[16,1], index: 2, kind: input, shape index: {}]
  %s3 = inlined_call_operand.vmem [shape: bf16[8,144], index: 3, kind: input, shape index: {}]
  %s4 = inlined_call_operand.vmem [shape: f32[8,1], index: 4, kind: input, shape index: {}]
  %s5 = inlined_call_operand.hbm [shape: f32[8,512], index: 5, kind: output, shape index: {}]
  %s6 = sld [smem:[#allocation0]]
  $region34: #{tpu_custom_call.1} parent=0
    _
  %s8 = ssub.s32 1, %s6
  %s9 = scalar_select 0, %s8, %s6
  $region1: #{tpu_custom_call.1} parent=0
    #allocation3 [shape = 'u8[16384]{0}', space=vmem, size = 0x4000, scoped, tag = 'input window, operand 0, single buffered']
    #allocation4 [shape = 's32[1]{0}', space=sflag, size = 0x4, scoped, tag = 'scoped memory for tpu_custom_call.1']
    #allocation5 [shape = 's32[1]{0}', space=sflag, size = 0x4, scoped, tag = 'scoped memory for tpu_custom_call.1']
    #allocation6 [shape = 'u8[16384]{0}', space=vmem, size = 0x4000, scoped, tag = 'output window, operand 0, single buffered']
    %10 = vsyncpa [#allocation4], 0
    %11 = vsyncpa [#allocation5], 0
    // Predicated region
    $region2: #{tpu_custom_call.1} parent=1 // pred_check
      _
    $region3: #{tpu_custom_call.1} parent=1 // pred_check_branch
      %13 = sbr.rel (0) target = $region5
    $region4: #{tpu_custom_call.1} parent=1 // pred_region
      %15 = vsyncadd [#allocation4], 0
      %s17 = sshll.u32 %s0, 4
      %s18 = int_to_ptr.hbm [resolvable:$true] %s17
      %s19 = sshll.u32 [#allocation3], 4
      %s20 = int_to_ptr.vmem [resolvable:$true] %s19
      %22 = dma.hbm_to_vmem [thread:$0]  %s18, 512, %s20, [#allocation4]
    $region5: #{tpu_custom_call.1} parent=1 // pred_fallthru
      _
    // Predicated region
    $region6: #{tpu_custom_call.1} parent=1 // pred_check
      _
    $region7: #{tpu_custom_call.1} parent=1 // pred_check_branch
      %24 = sbr.rel (0) target = $region9
    $region8: #{tpu_custom_call.1} parent=1 // pred_region
      _
    $region9: #{tpu_custom_call.1} parent=1 // pred_fallthru
      _
    // Predicated region
    $region10: #{tpu_custom_call.1} parent=1 // pred_check
      _
    $region11: #{tpu_custom_call.1} parent=1 // pred_check_branch
      %26 = sbr.rel (0) target = $region13
    $region12: #{tpu_custom_call.1} parent=1 // pred_region
      _
    $region13: #{tpu_custom_call.1} parent=1 // pred_fallthru
      _
    // Predicated region
    $region14: #{tpu_custom_call.1} parent=1 // pred_check
      _
    $region15: #{tpu_custom_call.1} parent=1 // pred_check_branch
      %28 = sbr.rel (0) target = $region17
    $region16: #{tpu_custom_call.1} parent=1 // pred_region
      _
    $region17: #{tpu_custom_call.1} parent=1 // pred_fallthru
      _
    // Predicated region
    $region18: #{tpu_custom_call.1} parent=1 // pred_check
      _
    $region19: #{tpu_custom_call.1} parent=1 // pred_check_branch
      %30 = sbr.rel (0) target = $region21
    $region20: #{tpu_custom_call.1} parent=1 // pred_region
      _
    $region21: #{tpu_custom_call.1} parent=1 // pred_fallthru
      _
    // Predicated region
    $region22: #{tpu_custom_call.1} parent=1 // pred_check
      _
    $region23: #{tpu_custom_call.1} parent=1 // pred_check_branch
      %32 = sbr.rel (0) target = $region25
    $region24: #{tpu_custom_call.1} parent=1 // pred_region
      %34 = dma.done [#allocation4], 512
    $region25: #{tpu_custom_call.1} parent=1 // pred_fallthru
      _
    %v36 = vld [vmem:[#allocation3] sm:$0xff]
    %v37 = vld [vmem:[#allocation3 + $0x8] sm:$0xff]
    %v38 = vld [vmem:[#allocation3 + $0x10] sm:$0xff]
    %v39 = vld [vmem:[#allocation3 + $0x18] sm:$0xff]
    %v40 = vld [vmem:[%s1] sm:$0xf]
    %v41 = vld [vmem:[%s1 + $0x4] sm:$0xf]
    %v42 = vpack.c.bf16 %v36, %v36
    %v43 = vpack.c.bf16 %v37, %v37
    %v44 = vpack.c.bf16 %v38, %v38
    %v45 = vpack.c.bf16 %v39, %v39
    %v46 = vld [vmem:[%s2] sm:$0xff]
    %v47 = vld [vmem:[%s2 + $0x8] sm:$0xff]
    %49 = vset.pattern.permute.xlu0 0
    %50 = vperm.xlu0 %49, %v46
    %v51 = vpop.permute.xlu0 %50
    %54 = vset.pattern.permute.xlu0 0
    %55 = vperm.xlu0 %54, %v47
    %v56 = vpop.permute.xlu0 %55
    %v60 = vunpack.c.l.b16 %v40
    %v61 = vunpack.c.l.b16 %v41
    %v62 = vpack.c.b16 %v61, %v60
    %vm63 = vcmask 64512
    %v65 = vsel %vm63, %v62, 0
    %vm67 = vcmask 1043456
    %v69 = vsel %vm67, %v42, 0
    %v72 = vsel %vm67, %v43, 0
    %v75 = vsel %vm67, %v44, 0
    %v78 = vsel %vm67, %v45, 0
    %80 = vmatpush.bf16.msra.mxu0 0
    %81 = vmatpush.bf16.msra.mxu0 0
    %82 = vmatpush.bf16.msra.mxu0 0
    %83 = vmatpush.bf16.msra.mxu0 0
    %84 = vmatpush.bf16.msra.mxu0 0
    %85 = vmatpush.bf16.msra.mxu0 0
    %86 = vmatpush.bf16.msra.mxu0 0
    %87 = vmatpush.bf16.msra.mxu0 %v69
    %88 = vmatmul.bf16.gmra.mxu0 %v65
    %v89 = vpop.f32.mrf.mxu0
    %v90 = vadd.f32 %v51, %v89
    %v91 = vpop.f32.mrf.mxu0
    %v92 = vadd.f32 %v56, %v91
    %93 = vdwg.mxu0
    %94 = vmatpush.bf16.msra.mxu0 0
    %95 = vmatpush.bf16.msra.mxu0 0
    %96 = vmatpush.bf16.msra.mxu0 0
    %97 = vmatpush.bf16.msra.mxu0 0
    %98 = vmatpush.bf16.msra.mxu0 0
    %99 = vmatpush.bf16.msra.mxu0 0
    %100 = vmatpush.bf16.msra.mxu0 0
    %101 = vmatpush.bf16.msra.mxu0 %v72
    %102 = vmatmul.bf16.gmra.mxu0 %v65
    %v103 = vpop.f32.mrf.mxu0
    %v104 = vadd.f32 %v51, %v103
    %v105 = vpop.f32.mrf.mxu0
    %v106 = vadd.f32 %v56, %v105
    %107 = vdwg.mxu0
    %108 = vmatpush.bf16.msra.mxu0 0
    %109 = vmatpush.bf16.msra.mxu0 0
    %110 = vmatpush.bf16.msra.mxu0 0
    %111 = vmatpush.bf16.msra.mxu0 0
    %112 = vmatpush.bf16.msra.mxu0 0
    %113 = vmatpush.bf16.msra.mxu0 0
    %114 = vmatpush.bf16.msra.mxu0 0
    %115 = vmatpush.bf16.msra.mxu0 %v75
    %116 = vmatmul.bf16.gmra.mxu0 %v65
    %v117 = vpop.f32.mrf.mxu0
    %v118 = vadd.f32 %v51, %v117
    %v119 = vpop.f32.mrf.mxu0
    %v120 = vadd.f32 %v56, %v119
    %121 = vdwg.mxu0
    %122 = vmatpush.bf16.msra.mxu0 0
    %123 = vmatpush.bf16.msra.mxu0 0
    %124 = vmatpush.bf16.msra.mxu0 0
    %125 = vmatpush.bf16.msra.mxu0 0
    %126 = vmatpush.bf16.msra.mxu0 0
    %127 = vmatpush.bf16.msra.mxu0 0
    %128 = vmatpush.bf16.msra.mxu0 0
    %129 = vmatpush.bf16.msra.mxu0 %v78
    %130 = vmatmul.bf16.gmra.mxu0 %v65
    %v131 = vpop.f32.mrf.mxu0
    %v132 = vadd.f32 %v51, %v131
    %v133 = vpop.f32.mrf.mxu0
    %v134 = vadd.f32 %v56, %v133
    %135 = vdwg.mxu0
    %v136 = vmul.f32 %v90, 1.442695
    %v137 = vpow.pop %v136
    %v138 = vmul.f32 %v104, 1.442695
    %v139 = vpow.pop %v138
    %v140 = vmul.f32 %v118, 1.442695
    %v141 = vpow.pop %v140
    %v142 = vmul.f32 %v132, 1.442695
    %v143 = vpow.pop %v142
    %v144 = vmul.f32 %v92, 1.442695
    %v145 = vpow.pop %v144
    %v146 = vmul.f32 %v106, 1.442695
    %v147 = vpow.pop %v146
    %v148 = vmul.f32 %v120, 1.442695
    %v149 = vpow.pop %v148
    %v150 = vmul.f32 %v134, 1.442695
    %v151 = vpow.pop %v150
    %v152 = vadd.f32 %v137, 1.0
    %v153 = vadd.f32 %v139, 1.0
    %v154 = vadd.f32 %v141, 1.0
    %v155 = vadd.f32 %v143, 1.0
    %v156 = vadd.f32 %v145, 1.0
    %v157 = vadd.f32 %v147, 1.0
    %v158 = vadd.f32 %v149, 1.0
    %v159 = vadd.f32 %v151, 1.0
    %v160 = vmul.f32 %v152, %v152
    %v161 = vmul.f32 %v153, %v153
    %v162 = vmul.f32 %v154, %v154
    %v163 = vmul.f32 %v155, %v155
    %v164 = vmul.f32 %v156, %v156
    %v165 = vmul.f32 %v157, %v157
    %v166 = vmul.f32 %v158, %v158
    %v167 = vmul.f32 %v159, %v159
    %v168 = vadd.f32 %v160, 1.0
    %v169 = vadd.f32 %v161, 1.0
    %v170 = vadd.f32 %v162, 1.0
    %v171 = vadd.f32 %v163, 1.0
    %v172 = vadd.f32 %v164, 1.0
    %v173 = vadd.f32 %v165, 1.0
    %v174 = vadd.f32 %v166, 1.0
    %v175 = vadd.f32 %v167, 1.0
    %v176 = vrcp.pop %v168
    %v177 = vrcp.pop %v169
    %v178 = vrcp.pop %v170
    %v179 = vrcp.pop %v171
    %v180 = vrcp.pop %v172
    %v181 = vrcp.pop %v173
    %v182 = vrcp.pop %v174
    %v183 = vrcp.pop %v175
    %v184 = vmul.f32 %v176, 2.0
    %v185 = vmul.f32 %v177, 2.0
    %v186 = vmul.f32 %v178, 2.0
    %v187 = vmul.f32 %v179, 2.0
    %v188 = vmul.f32 %v180, 2.0
    %v189 = vmul.f32 %v181, 2.0
    %v190 = vmul.f32 %v182, 2.0
    %v191 = vmul.f32 %v183, 2.0
    %v192 = vsub.f32 1.0, %v184
    %v193 = vsub.f32 1.0, %v185
    %v194 = vsub.f32 1.0, %v186
    %v195 = vsub.f32 1.0, %v187
    %v196 = vsub.f32 1.0, %v188
    %v197 = vsub.f32 1.0, %v189
    %v198 = vsub.f32 1.0, %v190
    %v199 = vsub.f32 1.0, %v191
    %v200 = vmul.f32 %v90, %v192
    %v201 = vmul.f32 %v104, %v193
    %v202 = vmul.f32 %v118, %v194
    %v203 = vmul.f32 %v132, %v195
    %v204 = vmul.f32 %v92, %v196
    %v205 = vmul.f32 %v106, %v197
    %v206 = vmul.f32 %v120, %v198
    %v207 = vmul.f32 %v134, %v199
    %v208 = vlaneseq
    %v209 = vand.u32 %v208, 127
    %v210 = vadd.s32 %v209, 128
    %v211 = vadd.s32 %v209, 256
    %v212 = vadd.s32 %v209, 384
    %v213 = vand.u32 %v209, 15
    %v214 = vand.u32 %v210, 15
    %v215 = vand.u32 %v211, 15
    %v216 = vand.u32 %v212, 15
    %v217 = vand.u32 %v209, 255
    %v218 = vand.u32 %v210, 255
    %v219 = vand.u32 %v211, 255
    %v220 = vand.u32 %v212, 255
    %vm221 = vcmp.ne.s32.totalorder %v213, 0
    %vm222 = vcmp.ne.s32.totalorder %v214, 0
    %vm223 = vcmp.ne.s32.totalorder %v215, 0
    %vm224 = vcmp.ne.s32.totalorder %v216, 0
    %vm225 = vcmp.ne.s32.totalorder %v213, 15
    %vm226 = vcmp.ne.s32.totalorder %v214, 15
    %vm227 = vcmp.ne.s32.totalorder %v215, 15
    %vm228 = vcmp.ne.s32.totalorder %v216, 15
    %vm229 = vcmp.ge.s32.totalorder %v217, 16
    %vm230 = vcmp.ge.s32.totalorder %v218, 16
    %vm231 = vcmp.ge.s32.totalorder %v219, 16
    %vm232 = vcmp.ge.s32.totalorder %v220, 16
    %vm233 = vcmp.lt.s32.totalorder %v217, 240
    %vm234 = vcmp.lt.s32.totalorder %v218, 240
    %vm235 = vcmp.lt.s32.totalorder %v219, 240
    %vm236 = vcmp.lt.s32.totalorder %v220, 240
    %237 = vrot.lane.b32.xlu0 %v200, 17
    %v238 = vpop.permute.xlu0 %237
    %239 = vrot.lane.b32.xlu0 %v204, 17
    %v240 = vpop.permute.xlu0 %239
    %241 = vrot.lane.b32.xlu0 %v201, 17
    %v242 = vpop.permute.xlu0 %241
    %243 = vrot.lane.b32.xlu0 %v205, 17
    %v244 = vpop.permute.xlu0 %243
    %245 = vrot.lane.b32.xlu0 %v202, 17
    %v246 = vpop.permute.xlu0 %245
    %247 = vrot.lane.b32.xlu0 %v206, 17
    %v248 = vpop.permute.xlu0 %247
    %249 = vrot.lane.b32.xlu0 %v203, 17
    %v250 = vpop.permute.xlu0 %249
    %251 = vrot.lane.b32.xlu0 %v207, 17
    %v252 = vpop.permute.xlu0 %251
    %vm253 = vcmp.lt.s32.totalorder %v209, 17
    %v254 = vsel %vm253, %v246, %v250
    %v255 = vsel %vm253, %v248, %v252
    %v256 = vsel %vm253, %v242, %v246
    %v257 = vsel %vm253, %v244, %v248
    %v258 = vsel %vm253, %v238, %v242
    %v259 = vsel %vm253, %v240, %v244
    %v260 = vsel %vm253, %v250, %v238
    %v261 = vsel %vm253, %v252, %v240
    %vm262 = vmand %vm229, %vm221
    %vm263 = vmand %vm230, %vm222
    %vm264 = vmand %vm231, %vm223
    %vm265 = vmand %vm232, %vm224
    %v266 = vsel %vm262, 1, 0
    %v267 = vsel %vm263, 1, 0
    %v268 = vsel %vm264, 1, 0
    %v269 = vsel %vm265, 1, 0
    %vm270 = vcmp.eq.s32.totalorder %v266, 1
    %vm271 = vcmp.eq.s32.totalorder %v267, 1
    %vm272 = vcmp.eq.s32.totalorder %v268, 1
    %vm273 = vcmp.eq.s32.totalorder %v269, 1
    %v274 = vsel %vm270, %v260, 0.0
    %v275 = vsel %vm271, %v258, 0.0
    %v276 = vsel %vm272, %v256, 0.0
    %v277 = vsel %vm273, %v254, 0.0
    %v278 = vsel %vm270, %v261, 0.0
    %v279 = vsel %vm271, %v259, 0.0
    %v280 = vsel %vm272, %v257, 0.0
    %v281 = vsel %vm273, %v255, 0.0
    %v282 = vpack.c.bf16 %v275, %v274
    %v283 = vpack.c.bf16 %v277, %v276
    %v284 = vpack.c.bf16 %v279, %v278
    %v285 = vpack.c.bf16 %v281, %v280
    %286 = vst [vmem:[#allocation2] sm:$0xff] %v282
    %287 = vst [vmem:[#allocation2 + $0x8] sm:$0xff] %v283
    %288 = vst [vmem:[#allocation2 + $0x10] sm:$0xff] %v284
    %289 = vst [vmem:[#allocation2 + $0x18] sm:$0xff] %v285
    %290 = vrot.lane.b32.xlu0 %v200, 16
    %v291 = vpop.permute.xlu0 %290
    %292 = vrot.lane.b32.xlu0 %v204, 16
    %v293 = vpop.permute.xlu0 %292
    %294 = vrot.lane.b32.xlu0 %v201, 16
    %v295 = vpop.permute.xlu0 %294
    %296 = vrot.lane.b32.xlu0 %v205, 16
    %v297 = vpop.permute.xlu0 %296
    %298 = vrot.lane.b32.xlu0 %v202, 16
    %v299 = vpop.permute.xlu0 %298
    %300 = vrot.lane.b32.xlu0 %v206, 16
    %v301 = vpop.permute.xlu0 %300
    %302 = vrot.lane.b32.xlu0 %v203, 16
    %v303 = vpop.permute.xlu0 %302
    %304 = vrot.lane.b32.xlu0 %v207, 16
    %v305 = vpop.permute.xlu0 %304
    %vm306 = vcmp.lt.s32.totalorder %v209, 16
    %v307 = vsel %vm306, %v299, %v303
    %v308 = vsel %vm306, %v301, %v305
    %v309 = vsel %vm306, %v295, %v299
    %v310 = vsel %vm306, %v297, %v301
    %v311 = vsel %vm306, %v291, %v295
    %v312 = vsel %vm306, %v293, %v297
    %v313 = vsel %vm306, %v303, %v291
    %v314 = vsel %vm306, %v305, %v293
    %v315 = vsel %vm229, 1, 0
    %v316 = vsel %vm230, 1, 0
    %v317 = vsel %vm231, 1, 0
    %v318 = vsel %vm232, 1, 0
    %vm319 = vcmp.eq.s32.totalorder %v315, 1
    %vm320 = vcmp.eq.s32.totalorder %v316, 1
    %vm321 = vcmp.eq.s32.totalorder %v317, 1
    %vm322 = vcmp.eq.s32.totalorder %v318, 1
    %v323 = vsel %vm319, %v313, 0.0
    %v324 = vsel %vm320, %v311, 0.0
    %v325 = vsel %vm321, %v309, 0.0
    %v326 = vsel %vm322, %v307, 0.0
    %v327 = vsel %vm319, %v314, 0.0
    %v328 = vsel %vm320, %v312, 0.0
    %v329 = vsel %vm321, %v310, 0.0
    %v330 = vsel %vm322, %v308, 0.0
    %v331 = vpack.c.bf16 %v324, %v323
    %v332 = vpack.c.bf16 %v326, %v325
    %v333 = vpack.c.bf16 %v328, %v327
    %v334 = vpack.c.bf16 %v330, %v329
    %335 = vst [vmem:[#allocation2 + $0x20] sm:$0xff] %v331
    %336 = vst [vmem:[#allocation2 + $0x28] sm:$0xff] %v332
    %337 = vst [vmem:[#allocation2 + $0x30] sm:$0xff] %v333
    %338 = vst [vmem:[#allocation2 + $0x38] sm:$0xff] %v334
    %339 = vrot.lane.b32.xlu0 %v200, 15
    %v340 = vpop.permute.xlu0 %339
    %341 = vrot.lane.b32.xlu0 %v204, 15
    %v342 = vpop.permute.xlu0 %341
    %343 = vrot.lane.b32.xlu0 %v201, 15
    %v344 = vpop.permute.xlu0 %343
    %345 = vrot.lane.b32.xlu0 %v205, 15
    %v346 = vpop.permute.xlu0 %345
    %347 = vrot.lane.b32.xlu0 %v202, 15
    %v348 = vpop.permute.xlu0 %347
    %349 = vrot.lane.b32.xlu0 %v206, 15
    %v350 = vpop.permute.xlu0 %349
    %351 = vrot.lane.b32.xlu0 %v203, 15
    %v352 = vpop.permute.xlu0 %351
    %353 = vrot.lane.b32.xlu0 %v207, 15
    %v354 = vpop.permute.xlu0 %353
    %vm355 = vcmp.lt.s32.totalorder %v209, 15
    %v356 = vsel %vm355, %v348, %v352
    %v357 = vsel %vm355, %v350, %v354
    %v358 = vsel %vm355, %v344, %v348
    %v359 = vsel %vm355, %v346, %v350
    %v360 = vsel %vm355, %v340, %v344
    %v361 = vsel %vm355, %v342, %v346
    %v362 = vsel %vm355, %v352, %v340
    %v363 = vsel %vm355, %v354, %v342
    %vm364 = vmand %vm229, %vm225
    %vm365 = vmand %vm230, %vm226
    %vm366 = vmand %vm231, %vm227
    %vm367 = vmand %vm232, %vm228
    %v368 = vsel %vm364, 1, 0
    %v369 = vsel %vm365, 1, 0
    %v370 = vsel %vm366, 1, 0
    %v371 = vsel %vm367, 1, 0
    %vm372 = vcmp.eq.s32.totalorder %v368, 1
    %vm373 = vcmp.eq.s32.totalorder %v369, 1
    %vm374 = vcmp.eq.s32.totalorder %v370, 1
    %vm375 = vcmp.eq.s32.totalorder %v371, 1
    %v376 = vsel %vm372, %v362, 0.0
    %v377 = vsel %vm373, %v360, 0.0
    %v378 = vsel %vm374, %v358, 0.0
    %v379 = vsel %vm375, %v356, 0.0
    %v380 = vsel %vm372, %v363, 0.0
    %v381 = vsel %vm373, %v361, 0.0
    %v382 = vsel %vm374, %v359, 0.0
    %v383 = vsel %vm375, %v357, 0.0
    %v384 = vpack.c.bf16 %v377, %v376
    %v385 = vpack.c.bf16 %v379, %v378
    %v386 = vpack.c.bf16 %v381, %v380
    %v387 = vpack.c.bf16 %v383, %v382
    %388 = vst [vmem:[#allocation2 + $0x40] sm:$0xff] %v384
    %389 = vst [vmem:[#allocation2 + $0x48] sm:$0xff] %v385
    %390 = vst [vmem:[#allocation2 + $0x50] sm:$0xff] %v386
    %391 = vst [vmem:[#allocation2 + $0x58] sm:$0xff] %v387
    %392 = vrot.lane.b32.xlu0 %v200, 1
    %v393 = vpop.permute.xlu0 %392
    %394 = vrot.lane.b32.xlu0 %v204, 1
    %v395 = vpop.permute.xlu0 %394
    %396 = vrot.lane.b32.xlu0 %v201, 1
    %v397 = vpop.permute.xlu0 %396
    %398 = vrot.lane.b32.xlu0 %v205, 1
    %v399 = vpop.permute.xlu0 %398
    %400 = vrot.lane.b32.xlu0 %v202, 1
    %v401 = vpop.permute.xlu0 %400
    %402 = vrot.lane.b32.xlu0 %v206, 1
    %v403 = vpop.permute.xlu0 %402
    %404 = vrot.lane.b32.xlu0 %v203, 1
    %v405 = vpop.permute.xlu0 %404
    %406 = vrot.lane.b32.xlu0 %v207, 1
    %v407 = vpop.permute.xlu0 %406
    %vm408 = vcmp.lt.s32.totalorder %v209, 1
    %v409 = vsel %vm408, %v401, %v405
    %v410 = vsel %vm408, %v403, %v407
    %v411 = vsel %vm408, %v397, %v401
    %v412 = vsel %vm408, %v399, %v403
    %v413 = vsel %vm408, %v393, %v397
    %v414 = vsel %vm408, %v395, %v399
    %v415 = vsel %vm408, %v405, %v393
    %v416 = vsel %vm408, %v407, %v395
    %v417 = vsel %vm221, 1, 0
    %v418 = vsel %vm222, 1, 0
    %v419 = vsel %vm223, 1, 0
    %v420 = vsel %vm224, 1, 0
    %vm421 = vcmp.eq.s32.totalorder %v417, 1
    %vm422 = vcmp.eq.s32.totalorder %v418, 1
    %vm423 = vcmp.eq.s32.totalorder %v419, 1
    %vm424 = vcmp.eq.s32.totalorder %v420, 1
    %v425 = vsel %vm421, %v415, 0.0
    %v426 = vsel %vm422, %v413, 0.0
    %v427 = vsel %vm423, %v411, 0.0
    %v428 = vsel %vm424, %v409, 0.0
    %v429 = vsel %vm421, %v416, 0.0
    %v430 = vsel %vm422, %v414, 0.0
    %v431 = vsel %vm423, %v412, 0.0
    %v432 = vsel %vm424, %v410, 0.0
    %v433 = vpack.c.bf16 %v426, %v425
    %v434 = vpack.c.bf16 %v428, %v427
    %v435 = vpack.c.bf16 %v430, %v429
    %v436 = vpack.c.bf16 %v432, %v431
    %437 = vst [vmem:[#allocation2 + $0x60] sm:$0xff] %v433
    %438 = vst [vmem:[#allocation2 + $0x68] sm:$0xff] %v434
    %439 = vst [vmem:[#allocation2 + $0x70] sm:$0xff] %v435
    %440 = vst [vmem:[#allocation2 + $0x78] sm:$0xff] %v436
    %v441 = vpack.c.bf16 %v201, %v200
    %v442 = vpack.c.bf16 %v203, %v202
    %v443 = vpack.c.bf16 %v205, %v204
    %v444 = vpack.c.bf16 %v207, %v206
    %445 = vst [vmem:[#allocation2 + $0x80] sm:$0xff] %v441
    %446 = vst [vmem:[#allocation2 + $0x88] sm:$0xff] %v442
    %447 = vst [vmem:[#allocation2 + $0x90] sm:$0xff] %v443
    %448 = vst [vmem:[#allocation2 + $0x98] sm:$0xff] %v444
    %449 = vrot.lane.b32.xlu0 %v200, 127
    %v450 = vpop.permute.xlu0 %449
    %451 = vrot.lane.b32.xlu0 %v204, 127
    %v452 = vpop.permute.xlu0 %451
    %453 = vrot.lane.b32.xlu0 %v201, 127
    %v454 = vpop.permute.xlu0 %453
    %455 = vrot.lane.b32.xlu0 %v205, 127
    %v456 = vpop.permute.xlu0 %455
    %457 = vrot.lane.b32.xlu0 %v202, 127
    %v458 = vpop.permute.xlu0 %457
    %459 = vrot.lane.b32.xlu0 %v206, 127
    %v460 = vpop.permute.xlu0 %459
    %461 = vrot.lane.b32.xlu0 %v203, 127
    %v462 = vpop.permute.xlu0 %461
    %463 = vrot.lane.b32.xlu0 %v207, 127
    %v464 = vpop.permute.xlu0 %463
    %vm465 = vcmp.lt.s32.totalorder %v209, 127
    %v466 = vsel %vm465, %v458, %v462
    %v467 = vsel %vm465, %v460, %v464
    %v468 = vsel %vm465, %v454, %v458
    %v469 = vsel %vm465, %v456, %v460
    %v470 = vsel %vm465, %v450, %v454
    %v471 = vsel %vm465, %v452, %v456
    %v472 = vsel %vm465, %v462, %v450
    %v473 = vsel %vm465, %v464, %v452
    %v474 = vsel %vm225, 1, 0
    %v475 = vsel %vm226, 1, 0
    %v476 = vsel %vm227, 1, 0
    %v477 = vsel %vm228, 1, 0
    %vm478 = vcmp.eq.s32.totalorder %v474, 1
    %vm479 = vcmp.eq.s32.totalorder %v475, 1
    %vm480 = vcmp.eq.s32.totalorder %v476, 1
    %vm481 = vcmp.eq.s32.totalorder %v477, 1
    %v482 = vsel %vm478, %v470, 0.0
    %v483 = vsel %vm479, %v468, 0.0
    %v484 = vsel %vm480, %v466, 0.0
    %v485 = vsel %vm481, %v472, 0.0
    %v486 = vsel %vm478, %v471, 0.0
    %v487 = vsel %vm479, %v469, 0.0
    %v488 = vsel %vm480, %v467, 0.0
    %v489 = vsel %vm481, %v473, 0.0
    %v490 = vpack.c.bf16 %v483, %v482
    %v491 = vpack.c.bf16 %v485, %v484
    %v492 = vpack.c.bf16 %v487, %v486
    %v493 = vpack.c.bf16 %v489, %v488
    %494 = vst [vmem:[#allocation2 + $0xa0] sm:$0xff] %v490
    %495 = vst [vmem:[#allocation2 + $0xa8] sm:$0xff] %v491
    %496 = vst [vmem:[#allocation2 + $0xb0] sm:$0xff] %v492
    %497 = vst [vmem:[#allocation2 + $0xb8] sm:$0xff] %v493
    %498 = vrot.lane.b32.xlu0 %v200, 113
    %v499 = vpop.permute.xlu0 %498
    %500 = vrot.lane.b32.xlu0 %v204, 113
    %v501 = vpop.permute.xlu0 %500
    %502 = vrot.lane.b32.xlu0 %v201, 113
    %v503 = vpop.permute.xlu0 %502
    %504 = vrot.lane.b32.xlu0 %v205, 113
    %v505 = vpop.permute.xlu0 %504
    %506 = vrot.lane.b32.xlu0 %v202, 113
    %v507 = vpop.permute.xlu0 %506
    %508 = vrot.lane.b32.xlu0 %v206, 113
    %v509 = vpop.permute.xlu0 %508
    %510 = vrot.lane.b32.xlu0 %v203, 113
    %v511 = vpop.permute.xlu0 %510
    %512 = vrot.lane.b32.xlu0 %v207, 113
    %v513 = vpop.permute.xlu0 %512
    %vm514 = vcmp.lt.s32.totalorder %v209, 113
    %v515 = vsel %vm514, %v507, %v511
    %v516 = vsel %vm514, %v509, %v513
    %v517 = vsel %vm514, %v503, %v507
    %v518 = vsel %vm514, %v505, %v509
    %v519 = vsel %vm514, %v499, %v503
    %v520 = vsel %vm514, %v501, %v505
    %v521 = vsel %vm514, %v511, %v499
    %v522 = vsel %vm514, %v513, %v501
    %vm523 = vmand %vm233, %vm221
    %vm524 = vmand %vm234, %vm222
    %vm525 = vmand %vm235, %vm223
    %vm526 = vmand %vm236, %vm224
    %v527 = vsel %vm523, 1, 0
    %v528 = vsel %vm524, 1, 0
    %v529 = vsel %vm525, 1, 0
    %v530 = vsel %vm526, 1, 0
    %vm531 = vcmp.eq.s32.totalorder %v527, 1
    %vm532 = vcmp.eq.s32.totalorder %v528, 1
    %vm533 = vcmp.eq.s32.totalorder %v529, 1
    %vm534 = vcmp.eq.s32.totalorder %v530, 1
    %v535 = vsel %vm531, %v519, 0.0
    %v536 = vsel %vm532, %v517, 0.0
    %v537 = vsel %vm533, %v515, 0.0
    %v538 = vsel %vm534, %v521, 0.0
    %v539 = vsel %vm531, %v520, 0.0
    %v540 = vsel %vm532, %v518, 0.0
    %v541 = vsel %vm533, %v516, 0.0
    %v542 = vsel %vm534, %v522, 0.0
    %v543 = vpack.c.bf16 %v536, %v535
    %v544 = vpack.c.bf16 %v538, %v537
    %v545 = vpack.c.bf16 %v540, %v539
    %v546 = vpack.c.bf16 %v542, %v541
    %547 = vst [vmem:[#allocation2 + $0xc0] sm:$0xff] %v543
    %548 = vst [vmem:[#allocation2 + $0xc8] sm:$0xff] %v544
    %549 = vst [vmem:[#allocation2 + $0xd0] sm:$0xff] %v545
    %550 = vst [vmem:[#allocation2 + $0xd8] sm:$0xff] %v546
    %551 = vrot.lane.b32.xlu0 %v200, 112
    %v552 = vpop.permute.xlu0 %551
    %553 = vrot.lane.b32.xlu0 %v204, 112
    %v554 = vpop.permute.xlu0 %553
    %555 = vrot.lane.b32.xlu0 %v201, 112
    %v556 = vpop.permute.xlu0 %555
    %557 = vrot.lane.b32.xlu0 %v205, 112
    %v558 = vpop.permute.xlu0 %557
    %559 = vrot.lane.b32.xlu0 %v202, 112
    %v560 = vpop.permute.xlu0 %559
    %561 = vrot.lane.b32.xlu0 %v206, 112
    %v562 = vpop.permute.xlu0 %561
    %563 = vrot.lane.b32.xlu0 %v203, 112
    %v564 = vpop.permute.xlu0 %563
    %565 = vrot.lane.b32.xlu0 %v207, 112
    %v566 = vpop.permute.xlu0 %565
    %vm567 = vcmp.lt.s32.totalorder %v209, 112
    %v568 = vsel %vm567, %v560, %v564
    %v569 = vsel %vm567, %v562, %v566
    %v570 = vsel %vm567, %v556, %v560
    %v571 = vsel %vm567, %v558, %v562
    %v572 = vsel %vm567, %v552, %v556
    %v573 = vsel %vm567, %v554, %v558
    %v574 = vsel %vm567, %v564, %v552
    %v575 = vsel %vm567, %v566, %v554
    %v576 = vsel %vm233, 1, 0
    %v577 = vsel %vm234, 1, 0
    %v578 = vsel %vm235, 1, 0
    %v579 = vsel %vm236, 1, 0
    %vm580 = vcmp.eq.s32.totalorder %v576, 1
    %vm581 = vcmp.eq.s32.totalorder %v577, 1
    %vm582 = vcmp.eq.s32.totalorder %v578, 1
    %vm583 = vcmp.eq.s32.totalorder %v579, 1
    %v584 = vsel %vm580, %v572, 0.0
    %v585 = vsel %vm581, %v570, 0.0
    %v586 = vsel %vm582, %v568, 0.0
    %v587 = vsel %vm583, %v574, 0.0
    %v588 = vsel %vm580, %v573, 0.0
    %v589 = vsel %vm581, %v571, 0.0
    %v590 = vsel %vm582, %v569, 0.0
    %v591 = vsel %vm583, %v575, 0.0
    %v592 = vpack.c.bf16 %v585, %v584
    %v593 = vpack.c.bf16 %v587, %v586
    %v594 = vpack.c.bf16 %v589, %v588
    %v595 = vpack.c.bf16 %v591, %v590
    %596 = vst [vmem:[#allocation2 + $0xe0] sm:$0xff] %v592
    %597 = vst [vmem:[#allocation2 + $0xe8] sm:$0xff] %v593
    %598 = vst [vmem:[#allocation2 + $0xf0] sm:$0xff] %v594
    %599 = vst [vmem:[#allocation2 + $0xf8] sm:$0xff] %v595
    %600 = vrot.lane.b32.xlu0 %v200, 111
    %v601 = vpop.permute.xlu0 %600
    %602 = vrot.lane.b32.xlu0 %v204, 111
    %v603 = vpop.permute.xlu0 %602
    %604 = vrot.lane.b32.xlu0 %v201, 111
    %v605 = vpop.permute.xlu0 %604
    %606 = vrot.lane.b32.xlu0 %v205, 111
    %v607 = vpop.permute.xlu0 %606
    %608 = vrot.lane.b32.xlu0 %v202, 111
    %v609 = vpop.permute.xlu0 %608
    %610 = vrot.lane.b32.xlu0 %v206, 111
    %v611 = vpop.permute.xlu0 %610
    %612 = vrot.lane.b32.xlu0 %v203, 111
    %v613 = vpop.permute.xlu0 %612
    %614 = vrot.lane.b32.xlu0 %v207, 111
    %v615 = vpop.permute.xlu0 %614
    %vm616 = vcmp.lt.s32.totalorder %v209, 111
    %v617 = vsel %vm616, %v609, %v613
    %v618 = vsel %vm616, %v611, %v615
    %v619 = vsel %vm616, %v605, %v609
    %v620 = vsel %vm616, %v607, %v611
    %v621 = vsel %vm616, %v601, %v605
    %v622 = vsel %vm616, %v603, %v607
    %v623 = vsel %vm616, %v613, %v601
    %v624 = vsel %vm616, %v615, %v603
    %vm625 = vmand %vm233, %vm225
    %vm626 = vmand %vm234, %vm226
    %vm627 = vmand %vm235, %vm227
    %vm628 = vmand %vm236, %vm228
    %v629 = vsel %vm625, 1, 0
    %v630 = vsel %vm626, 1, 0
    %v631 = vsel %vm627, 1, 0
    %v632 = vsel %vm628, 1, 0
    %vm633 = vcmp.eq.s32.totalorder %v629, 1
    %vm634 = vcmp.eq.s32.totalorder %v630, 1
    %vm635 = vcmp.eq.s32.totalorder %v631, 1
    %vm636 = vcmp.eq.s32.totalorder %v632, 1
    %v637 = vsel %vm633, %v621, 0.0
    %v638 = vsel %vm634, %v619, 0.0
    %v639 = vsel %vm635, %v617, 0.0
    %v640 = vsel %vm636, %v623, 0.0
    %v641 = vsel %vm633, %v622, 0.0
    %v642 = vsel %vm634, %v620, 0.0
    %v643 = vsel %vm635, %v618, 0.0
    %v644 = vsel %vm636, %v624, 0.0
    %v645 = vpack.c.bf16 %v638, %v637
    %v646 = vpack.c.bf16 %v640, %v639
    %v647 = vpack.c.bf16 %v642, %v641
    %v648 = vpack.c.bf16 %v644, %v643
    %649 = vst [vmem:[#allocation2 + $0x100] sm:$0xff] %v645
    %650 = vst [vmem:[#allocation2 + $0x108] sm:$0xff] %v646
    %651 = vst [vmem:[#allocation2 + $0x110] sm:$0xff] %v647
    %652 = vst [vmem:[#allocation2 + $0x118] sm:$0xff] %v648
    %v653 = vld [vmem:[%s3] sm:$0xff]
    %v654 = vld [vmem:[#allocation2] sm:$0xff]
    %v655 = vld [vmem:[#allocation2 + $0x8] sm:$0xff]
    %v656 = vld [vmem:[#allocation2 + $0x10] sm:$0xff]
    %v657 = vld [vmem:[#allocation2 + $0x18] sm:$0xff]
    %v658 = vld [vmem:[#allocation2 + $0x20] sm:$0xff]
    %v659 = vld [vmem:[#allocation2 + $0x28] sm:$0xff]
    %v660 = vld [vmem:[#allocation2 + $0x30] sm:$0xff]
    %v661 = vld [vmem:[#allocation2 + $0x38] sm:$0xff]
    %v662 = vld [vmem:[#allocation2 + $0x40] sm:$0xff]
    %v663 = vld [vmem:[#allocation2 + $0x48] sm:$0xff]
    %v664 = vld [vmem:[#allocation2 + $0x50] sm:$0xff]
    %v665 = vld [vmem:[#allocation2 + $0x58] sm:$0xff]
    %v666 = vld [vmem:[#allocation2 + $0x60] sm:$0xff]
    %v667 = vld [vmem:[#allocation2 + $0x68] sm:$0xff]
    %v668 = vld [vmem:[#allocation2 + $0x70] sm:$0xff]
    %v669 = vld [vmem:[#allocation2 + $0x78] sm:$0xff]
    %v670 = vld [vmem:[#allocation2 + $0x80] sm:$0xff]
    %v671 = vld [vmem:[#allocation2 + $0x88] sm:$0xff]
    %v672 = vld [vmem:[#allocation2 + $0x90] sm:$0xff]
    %v673 = vld [vmem:[#allocation2 + $0x98] sm:$0xff]
    %v674 = vld [vmem:[#allocation2 + $0xa0] sm:$0xff]
    %v675 = vld [vmem:[#allocation2 + $0xa8] sm:$0xff]
    %v676 = vld [vmem:[#allocation2 + $0xb0] sm:$0xff]
    %v677 = vld [vmem:[#allocation2 + $0xb8] sm:$0xff]
    %v678 = vld [vmem:[#allocation2 + $0xc0] sm:$0xff]
    %v679 = vld [vmem:[#allocation2 + $0xc8] sm:$0xff]
    %v680 = vld [vmem:[#allocation2 + $0xd0] sm:$0xff]
    %v681 = vld [vmem:[#allocation2 + $0xd8] sm:$0xff]
    %v682 = vld [vmem:[#allocation2 + $0xe0] sm:$0xff]
    %v683 = vld [vmem:[#allocation2 + $0xe8] sm:$0xff]
    %v684 = vld [vmem:[#allocation2 + $0xf0] sm:$0xff]
    %v685 = vld [vmem:[#allocation2 + $0xf8] sm:$0xff]
    %v686 = vld [vmem:[#allocation2 + $0x100] sm:$0xff]
    %v687 = vld [vmem:[#allocation2 + $0x108] sm:$0xff]
    %v688 = vld [vmem:[#allocation2 + $0x110] sm:$0xff]
    %v689 = vld [vmem:[#allocation2 + $0x118] sm:$0xff]
    %v690 = vld [vmem:[%s4] sm:$0xff]
    %692 = vset.pattern.permute.xlu0 0
    %693 = vperm.xlu0 %692, %v690
    %v694 = vpop.permute.xlu0 %693
    %v697 = vunpack.c.l.b16 %v653
    %v698 = vunpack.c.h.b16 %v653
    %v699 = vpack.c.b16 %v697, %v697
    %v700 = vpack.c.b16 %v698, %v698
    %v738 = vunpack.c.l.b16 %v654
    %v739 = vunpack.c.h.b16 %v654
    %v740 = vunpack.c.l.b16 %v655
    %v741 = vunpack.c.h.b16 %v655
    %v742 = vunpack.c.l.b16 %v656
    %v743 = vunpack.c.h.b16 %v656
    %v744 = vunpack.c.l.b16 %v657
    %v745 = vunpack.c.h.b16 %v657
    %v746 = vunpack.c.l.b16 %v658
    %v747 = vunpack.c.h.b16 %v658
    %v748 = vunpack.c.l.b16 %v659
    %v749 = vunpack.c.h.b16 %v659
    %v750 = vunpack.c.l.b16 %v660
    %v751 = vunpack.c.h.b16 %v660
    %v752 = vunpack.c.l.b16 %v661
    %v753 = vunpack.c.h.b16 %v661
    %v754 = vunpack.c.l.b16 %v662
    %v755 = vunpack.c.h.b16 %v662
    %v756 = vunpack.c.l.b16 %v663
    %v757 = vunpack.c.h.b16 %v663
    %v758 = vunpack.c.l.b16 %v664
    %v759 = vunpack.c.h.b16 %v664
    %v760 = vunpack.c.l.b16 %v665
    %v761 = vunpack.c.h.b16 %v665
    %v762 = vunpack.c.l.b16 %v666
    %v763 = vunpack.c.h.b16 %v666
    %v764 = vunpack.c.l.b16 %v667
    %v765 = vunpack.c.h.b16 %v667
    %v766 = vunpack.c.l.b16 %v668
    %v767 = vunpack.c.h.b16 %v668
    %v768 = vunpack.c.l.b16 %v669
    %v769 = vunpack.c.h.b16 %v669
    %v770 = vunpack.c.l.b16 %v670
    %v771 = vunpack.c.h.b16 %v670
    %v772 = vunpack.c.l.b16 %v671
    %v773 = vunpack.c.h.b16 %v671
    %v774 = vunpack.c.l.b16 %v672
    %v775 = vunpack.c.h.b16 %v672
    %v776 = vunpack.c.l.b16 %v673
    %v777 = vunpack.c.h.b16 %v673
    %v778 = vunpack.c.l.b16 %v674
    %v779 = vunpack.c.h.b16 %v674
    %v780 = vunpack.c.l.b16 %v675
    %v781 = vunpack.c.h.b16 %v675
    %v782 = vunpack.c.l.b16 %v676
    %v783 = vunpack.c.h.b16 %v676
    %v784 = vunpack.c.l.b16 %v677
    %v785 = vunpack.c.h.b16 %v677
    %v786 = vunpack.c.l.b16 %v678
    %v787 = vunpack.c.h.b16 %v678
    %v788 = vunpack.c.l.b16 %v679
    %v789 = vunpack.c.h.b16 %v679
    %v790 = vunpack.c.l.b16 %v680
    %v791 = vunpack.c.h.b16 %v680
    %v792 = vunpack.c.l.b16 %v681
    %v793 = vunpack.c.h.b16 %v681
    %v794 = vunpack.c.l.b16 %v682
    %v795 = vunpack.c.h.b16 %v682
    %v796 = vunpack.c.l.b16 %v683
    %v797 = vunpack.c.h.b16 %v683
    %v798 = vunpack.c.l.b16 %v684
    %v799 = vunpack.c.h.b16 %v684
    %v800 = vunpack.c.l.b16 %v685
    %v801 = vunpack.c.h.b16 %v685
    %v802 = vunpack.c.l.b16 %v686
    %v803 = vunpack.c.h.b16 %v686
    %v804 = vunpack.c.l.b16 %v687
    %v805 = vunpack.c.h.b16 %v687
    %v806 = vunpack.c.l.b16 %v688
    %v807 = vunpack.c.h.b16 %v688
    %v808 = vunpack.c.l.b16 %v689
    %v809 = vunpack.c.h.b16 %v689
    %v810 = vpack.c.b16 %v742, %v738
    %v811 = vpack.c.b16 %v743, %v739
    %v812 = vpack.c.b16 %v744, %v740
    %v813 = vpack.c.b16 %v745, %v741
    %v814 = vpack.c.b16 %v750, %v746
    %v815 = vpack.c.b16 %v751, %v747
    %v816 = vpack.c.b16 %v752, %v748
    %v817 = vpack.c.b16 %v753, %v749
    %v818 = vpack.c.b16 %v758, %v754
    %v819 = vpack.c.b16 %v759, %v755
    %v820 = vpack.c.b16 %v760, %v756
    %v821 = vpack.c.b16 %v761, %v757
    %v822 = vpack.c.b16 %v766, %v762
    %v823 = vpack.c.b16 %v767, %v763
    %v824 = vpack.c.b16 %v768, %v764
    %v825 = vpack.c.b16 %v769, %v765
    %v826 = vpack.c.b16 %v774, %v770
    %v827 = vpack.c.b16 %v775, %v771
    %v828 = vpack.c.b16 %v776, %v772
    %v829 = vpack.c.b16 %v777, %v773
    %v830 = vpack.c.b16 %v782, %v778
    %v831 = vpack.c.b16 %v783, %v779
    %v832 = vpack.c.b16 %v784, %v780
    %v833 = vpack.c.b16 %v785, %v781
    %v834 = vpack.c.b16 %v790, %v786
    %v835 = vpack.c.b16 %v791, %v787
    %v836 = vpack.c.b16 %v792, %v788
    %v837 = vpack.c.b16 %v793, %v789
    %v838 = vpack.c.b16 %v798, %v794
    %v839 = vpack.c.b16 %v799, %v795
    %v840 = vpack.c.b16 %v800, %v796
    %v841 = vpack.c.b16 %v801, %v797
    %v842 = vpack.c.b16 %v806, %v802
    %v843 = vpack.c.b16 %v807, %v803
    %v844 = vpack.c.b16 %v808, %v804
    %v845 = vpack.c.b16 %v809, %v805
    %vm882 = vcmask 130048
    %v884 = vsel %vm882, %v700, 0
    %886 = vmatpush.bf16.msra.mxu0 %v838
    %887 = vmatpush.bf16.msra.mxu0 %v834
    %888 = vmatpush.bf16.msra.mxu0 %v830
    %889 = vmatpush.bf16.msra.mxu0 %v826
    %890 = vmatpush.bf16.msra.mxu0 %v822
    %891 = vmatpush.bf16.msra.mxu0 %v818
    %892 = vmatpush.bf16.msra.mxu0 %v814
    %893 = vmatpush.bf16.msra.mxu0 %v810
    %894 = vmatmul.bf16.gmra.mxu0 %v699
    %v895 = vpop.f32.mrf.mxu0
    %v896 = vadd.f32 %v694, %v895
    %v897 = vpop.f32.mrf.mxu0
    %898 = vdwg.mxu0
    %899 = vmatpush.bf16.msra.mxu0 0
    %900 = vmatpush.bf16.msra.mxu0 0
    %901 = vmatpush.bf16.msra.mxu0 0
    %902 = vmatpush.bf16.msra.mxu0 0
    %903 = vmatpush.bf16.msra.mxu0 0
    %904 = vmatpush.bf16.msra.mxu0 0
    %905 = vmatpush.bf16.msra.mxu0 0
    %906 = vmatpush.bf16.msra.mxu0 %v842
    %907 = vmatmul.bf16.gmra.mxu0 %v884
    %v908 = vpop.f32.mrf.mxu0
    %v909 = vadd.f32 %v896, %v908
    %v910 = vpop.f32.mrf.mxu0
    %911 = vdwg.mxu0
    %912 = vmatpush.bf16.msra.mxu0 %v839
    %913 = vmatpush.bf16.msra.mxu0 %v835
    %914 = vmatpush.bf16.msra.mxu0 %v831
    %915 = vmatpush.bf16.msra.mxu0 %v827
    %916 = vmatpush.bf16.msra.mxu0 %v823
    %917 = vmatpush.bf16.msra.mxu0 %v819
    %918 = vmatpush.bf16.msra.mxu0 %v815
    %919 = vmatpush.bf16.msra.mxu0 %v811
    %920 = vmatmul.bf16.gmra.mxu0 %v699
    %v921 = vpop.f32.mrf.mxu0
    %v922 = vadd.f32 %v694, %v921
    %v923 = vpop.f32.mrf.mxu0
    %924 = vdwg.mxu0
    %925 = vmatpush.bf16.msra.mxu0 0
    %926 = vmatpush.bf16.msra.mxu0 0
    %927 = vmatpush.bf16.msra.mxu0 0
    %928 = vmatpush.bf16.msra.mxu0 0
    %929 = vmatpush.bf16.msra.mxu0 0
    %930 = vmatpush.bf16.msra.mxu0 0
    %931 = vmatpush.bf16.msra.mxu0 0
    %932 = vmatpush.bf16.msra.mxu0 %v843
    %933 = vmatmul.bf16.gmra.mxu0 %v884
    %v934 = vpop.f32.mrf.mxu0
    %v935 = vadd.f32 %v922, %v934
    %v936 = vpop.f32.mrf.mxu0
    %937 = vdwg.mxu0
    %938 = vmatpush.bf16.msra.mxu0 %v840
    %939 = vmatpush.bf16.msra.mxu0 %v836
    %940 = vmatpush.bf16.msra.mxu0 %v832
    %941 = vmatpush.bf16.msra.mxu0 %v828
    %942 = vmatpush.bf16.msra.mxu0 %v824
    %943 = vmatpush.bf16.msra.mxu0 %v820
    %944 = vmatpush.bf16.msra.mxu0 %v816
    %945 = vmatpush.bf16.msra.mxu0 %v812
    %946 = vmatmul.bf16.gmra.mxu0 %v699
    %v947 = vpop.f32.mrf.mxu0
    %v948 = vadd.f32 %v694, %v947
    %v949 = vpop.f32.mrf.mxu0
    %950 = vdwg.mxu0
    %951 = vmatpush.bf16.msra.mxu0 0
    %952 = vmatpush.bf16.msra.mxu0 0
    %953 = vmatpush.bf16.msra.mxu0 0
    %954 = vmatpush.bf16.msra.mxu0 0
    %955 = vmatpush.bf16.msra.mxu0 0
    %956 = vmatpush.bf16.msra.mxu0 0
    %957 = vmatpush.bf16.msra.mxu0 0
    %958 = vmatpush.bf16.msra.mxu0 %v844
    %959 = vmatmul.bf16.gmra.mxu0 %v884
    %v960 = vpop.f32.mrf.mxu0
    %v961 = vadd.f32 %v948, %v960
    %v962 = vpop.f32.mrf.mxu0
    %963 = vdwg.mxu0
    %964 = vmatpush.bf16.msra.mxu0 %v841
    %965 = vmatpush.bf16.msra.mxu0 %v837
    %966 = vmatpush.bf16.msra.mxu0 %v833
    %967 = vmatpush.bf16.msra.mxu0 %v829
    %968 = vmatpush.bf16.msra.mxu0 %v825
    %969 = vmatpush.bf16.msra.mxu0 %v821
    %970 = vmatpush.bf16.msra.mxu0 %v817
    %971 = vmatpush.bf16.msra.mxu0 %v813
    %972 = vmatmul.bf16.gmra.mxu0 %v699
    %v973 = vpop.f32.mrf.mxu0
    %v974 = vadd.f32 %v694, %v973
    %v975 = vpop.f32.mrf.mxu0
    %976 = vdwg.mxu0
    %977 = vmatpush.bf16.msra.mxu0 0
    %978 = vmatpush.bf16.msra.mxu0 0
    %979 = vmatpush.bf16.msra.mxu0 0
    %980 = vmatpush.bf16.msra.mxu0 0
    %981 = vmatpush.bf16.msra.mxu0 0
    %982 = vmatpush.bf16.msra.mxu0 0
    %983 = vmatpush.bf16.msra.mxu0 0
    %984 = vmatpush.bf16.msra.mxu0 %v845
    %985 = vmatmul.bf16.gmra.mxu0 %v884
    %v986 = vpop.f32.mrf.mxu0
    %v987 = vadd.f32 %v974, %v986
    %v988 = vpop.f32.mrf.mxu0
    %989 = vdwg.mxu0
    %v990 = vmul.f32 %v909, 1.442695
    %v991 = vpow.pop %v990
    %v992 = vmul.f32 %v935, 1.442695
    %v993 = vpow.pop %v992
    %v994 = vmul.f32 %v961, 1.442695
    %v995 = vpow.pop %v994
    %v996 = vmul.f32 %v987, 1.442695
    %v997 = vpow.pop %v996
    %v998 = vadd.f32 %v991, 1.0
    %v999 = vadd.f32 %v993, 1.0
    %v1000 = vadd.f32 %v995, 1.0
    %v1001 = vadd.f32 %v997, 1.0
    %v1002 = vmul.f32 %v998, %v998
    %v1003 = vmul.f32 %v999, %v999
    %v1004 = vmul.f32 %v1000, %v1000
    %v1005 = vmul.f32 %v1001, %v1001
    %v1006 = vadd.f32 %v1002, 1.0
    %v1007 = vadd.f32 %v1003, 1.0
    %v1008 = vadd.f32 %v1004, 1.0
    %v1009 = vadd.f32 %v1005, 1.0
    %v1010 = vrcp.pop %v1006
    %v1011 = vrcp.pop %v1007
    %v1012 = vrcp.pop %v1008
    %v1013 = vrcp.pop %v1009
    %v1014 = vmul.f32 %v1010, 2.0
    %v1015 = vmul.f32 %v1011, 2.0
    %v1016 = vmul.f32 %v1012, 2.0
    %v1017 = vmul.f32 %v1013, 2.0
    %v1018 = vsub.f32 1.0, %v1014
    %v1019 = vsub.f32 1.0, %v1015
    %v1020 = vsub.f32 1.0, %v1016
    %v1021 = vsub.f32 1.0, %v1017
    %v1022 = vmul.f32 %v909, %v1018
    %v1023 = vmul.f32 %v935, %v1019
    %v1024 = vmul.f32 %v961, %v1020
    %v1025 = vmul.f32 %v987, %v1021
    %v1026 = vadd.f32 %v1022, %v36
    %v1027 = vadd.f32 %v1023, %v37
    %v1028 = vadd.f32 %v1024, %v38
    %v1029 = vadd.f32 %v1025, %v39
    %1030 = vst [vmem:[#allocation6] sm:$0xff] %v1026
    %1031 = vst [vmem:[#allocation6 + $0x8] sm:$0xff] %v1027
    %1032 = vst [vmem:[#allocation6 + $0x10] sm:$0xff] %v1028
    %1033 = vst [vmem:[#allocation6 + $0x18] sm:$0xff] %v1029
    // Predicated region
    $region26: #{tpu_custom_call.1} parent=1 // pred_check
      _
    $region27: #{tpu_custom_call.1} parent=1 // pred_check_branch
      %1035 = sbr.rel (0) target = $region29
    $region28: #{tpu_custom_call.1} parent=1 // pred_region
      %1037 = vsyncadd [#allocation5], 0
      %s1039 = sshll.u32 [#allocation6], 4
      %s1040 = int_to_ptr.vmem [resolvable:$true] %s1039
      %s1041 = sshll.u32 %s5, 4
      %s1042 = int_to_ptr.hbm [resolvable:$true] %s1041
      %1044 = dma.vmem_to_hbm [thread:$0]  %s1040, 512, %s1042, [#allocation5]
    $region29: #{tpu_custom_call.1} parent=1 // pred_fallthru
      _
    // Predicated region
    $region30: #{tpu_custom_call.1} parent=1 // pred_check
      _
    $region31: #{tpu_custom_call.1} parent=1 // pred_check_branch
      %1046 = sbr.rel (0) target = $region33
    $region32: #{tpu_custom_call.1} parent=1 // pred_region
      %1048 = dma.done [#allocation5], 512
    $region33: #{tpu_custom_call.1} parent=1 // pred_fallthru
      _
    %1049 = vsyncpa [#allocation4], 1
    %1050 = vsyncpa [#allocation5], 1

</llo_original>
